<compile_context>
chip_gen: v7x
topology: tpu7x:2x2x1
jax: 0.10.0
libtpu: 0.0.40
codegen_flags: <defaults>
</compile_context>

<pallas_src>
import inspect

import jax
import jax.numpy as jnp
from jax.experimental import pallas as pl
from jax.experimental.pallas import tpu as pltpu

_MiB = 1024 * 1024
_INV_SQRT2 = 0.7071067811865476
_SQRT_2_OVER_PI = 0.7978845608028654


# --------------------------------------------------------------------------
# Kernel bodies
# --------------------------------------------------------------------------
def _gelu_f32(h, approximate):
    if approximate:
        # tanh-approx GELU: the transcendental goes to the EUP slot (free-ish
        # when the VPU is the saturating slot).  Semantics differ slightly
        # from exact erf, so it is opt-in.
        u = _SQRT_2_OVER_PI * (h + 0.044715 * (h * h * h))
        return 0.5 * h * (1.0 + jnp.tanh(u))
    # Exact erf GELU (PyTorch nn.GELU() default).
    return 0.5 * h * (1.0 + jax.lax.erf(h * _INV_SQRT2))


def _make_fused_kernel(approx_gelu):
    """Resident-weight path: the whole hidden dim fits in one tile (n_h == 1)."""

    def kernel(x_ref, w1_ref, b1_ref, w2_ref, b2_ref, o_ref):
        # x_ref:(TM,C)  w1_ref:(C,H)  b1_ref:(1,H)  w2_ref:(H,C)  b2_ref:(1,C)
        cdt = w1_ref.dtype  # MXU compute dtype (bf16 or f32); accumulation f32
        h = jnp.dot(x_ref[...].astype(cdt), w1_ref[...],
                    preferred_element_type=jnp.float32)
        h = _gelu_f32(h + b1_ref[...], approx_gelu)
        y = jnp.dot(h.astype(cdt), w2_ref[...],
                    preferred_element_type=jnp.float32)
        # Dropout is identity in eval mode.
        o_ref[...] = (y + b2_ref[...]).astype(o_ref.dtype)

    return kernel


def _make_reduce_kernel(approx_gelu):
    """Hidden-dim reduction path: grid=(n_m, n_h), H innermost ("arbitrary")."""

    def kernel(x_ref, w1_ref, b1_ref, w2_ref, b2_ref, o_ref, acc_ref):
        # x_ref:(TM,C) w1_ref:(C,TH) b1_ref:(1,TH) w2_ref:(TH,C) b2_ref:(1,C)
        # acc_ref:(TM,C) f32, resident across the H reduction axis.
        k = pl.program_id(1)
        cdt = w1_ref.dtype
        h = jnp.dot(x_ref[...].astype(cdt), w1_ref[...],
                    preferred_element_type=jnp.float32)
        h = _gelu_f32(h + b1_ref[...], approx_gelu)
        part = jnp.dot(h.astype(cdt), w2_ref[...],
                       preferred_element_type=jnp.float32)

        @pl.when(k == 0)
        def _first():
            # Direct write: skips the (TM, C) zero-fill + read-modify-write.
            acc_ref[...] = part

        @pl.when(k > 0)
        def _rest():
            acc_ref[...] += part

        @pl.when(k == pl.num_programs(1) - 1)
        def _store():
            # Dropout is identity in eval mode.
            o_ref[...] = (acc_ref[...] + b2_ref[...]).astype(o_ref.dtype)

    return kernel


# --------------------------------------------------------------------------
# Tiling / VMEM policy
# --------------------------------------------------------------------------
def _vmem_policy():
    """(budget_bytes, vmem_limit_bytes, assume_two_tensorcores)."""
    phys = None
    try:
        info = pltpu.get_tpu_info()
        phys = getattr(info, "vmem_capacity_bytes", None)
    except Exception:  # hardware query only; conservative fallback below
        phys = None
    if not phys:
        phys = 64 * _MiB  # conservative: v7x per-TensorCore size
    if phys >= 100 * _MiB:
        # v5e / v6e: 128 MiB physical VMEM -> use most of it.
        budget = min(phys - 24 * _MiB, 104 * _MiB)
        limit = min(phys - 16 * _MiB, 112 * _MiB)
        two_cores = False
    else:
        # v7x: 64 MiB per TensorCore -> leave headroom for Mosaic scratch.
        budget = max(16 * _MiB, min(48 * _MiB, phys - 16 * _MiB))
        limit = max(budget, min(56 * _MiB, phys - 8 * _MiB))
        two_cores = True  # 2 TCs per chip: keep >= 2 parallel M blocks
    return int(budget), int(limit), two_cores


def _choose_tiles(m, c, h, *, budget, x_bytes, out_bytes, w_bytes,
                  row_align, prefer_split_m):
    """Pick (TM, TH).  Prefer TH = H (resident weights, n_h == 1); spend the
    remaining budget on TM (weight HBM re-reads scale with n_m, not TH)."""

    def working_set(tm, th):
        n_h = pl.cdiv(h, th)
        w_bufs = 1 if n_h == 1 else 2          # single-buffered when resident
        act = 2 * tm * c * x_bytes + 2 * tm * c * out_bytes   # x / out tiles
        acc = 0 if n_h == 1 else tm * c * 4                    # f32 accumulator
        hidden = 2 * tm * th * 4               # f32 h + GELU temps / bf16 copy
        wts = w_bufs * 2 * c * th * w_bytes    # W1 + W2 tiles
        bias = w_bufs * (th + c) * 4
        return act + acc + hidden + wts + bias

    # Hidden-tile candidates: full H first, then halves that stay multiples of
    # 128 (and hence exact divisors of H).
    th_list = [h]
    t = h
    while t % 2 == 0 and (t // 2) % 128 == 0:
        t //= 2
        th_list.append(t)

    # M-tile candidates, largest first (cap raised well above 256).
    def round_tm(v):
        if m < row_align:
            return m
        v = max(row_align, (v // row_align) * row_align)
        return min(v, m)

    tm_list = sorted({round_tm(v) for v in
                      (1024, 768, 512, 384, 256, 192, 128, 96, 64, 48, 32, 16, 8)},
                     reverse=True)

    for th in th_list:
        for tm in tm_list:
            if working_set(tm, th) <= budget:
                if prefer_split_m and pl.cdiv(m, tm) < 2 and m >= 16:
                    # v7x: split so the "parallel" M axis covers both cores.
                    half = ((tm // 2) // row_align) * row_align
                    if half < 8:
                        half = ((tm // 2) // 8) * 8
                    if half >= 8:
                        tm = half
                return tm, th
    return tm_list[-1], th_list[-1]


def _single_buffer_kwargs():
    """pipeline_mode kwargs for grid-invariant blocks, gated by an explicit
    capability check (no broad try/except around the pallas_call)."""
    if not hasattr(pl, "Buffered"):
        return {}
    try:
        params = inspect.signature(pl.BlockSpec).parameters
    except (TypeError, ValueError):
        return {}
    if "pipeline_mode" not in params:
        return {}
    return {"pipeline_mode": pl.Buffered(1)}


# --------------------------------------------------------------------------
# Wrapper
# --------------------------------------------------------------------------
def mlp_forward(x, w1, b1, w2, b2, *, block_m=None, block_h=None,
                compute_dtype=jnp.bfloat16, approx_gelu=False,
                vmem_budget_bytes=None):
    """x: (B, T, C) -> (B, T, C).

    compute_dtype: dtype fed to the MXU (bf16 default; pass jnp.float32 to opt
    out).  Accumulation, bias add and GELU are always f32.
    """
    B, T, C = x.shape
    M = B * T
    H = w1.shape[1]
    assert w1.shape == (C, H) and w2.shape == (H, C)
    assert b1.shape == (H,) and b2.shape == (C,)

    compute_dtype = jnp.dtype(compute_dtype)
    out_dtype = x.dtype

    # Weights DMA'd in the MXU compute dtype (halves weight traffic/VMEM for
    # bf16).  Biases stay f32 (elementwise path is f32 on every generation).
    w1c = w1.astype(compute_dtype)
    w2c = w2.astype(compute_dtype)
    b1_2d = b1.reshape(1, H).astype(jnp.float32)
    b2_2d = b2.reshape(1, C).astype(jnp.float32)
    x2 = x.reshape(M, C)

    budget_auto, vmem_limit, two_cores = _vmem_policy()
    budget = int(vmem_budget_bytes) if vmem_budget_bytes is not None else budget_auto
    vmem_limit = int(max(vmem_limit, budget))

    # bf16 packs two rows per sublane -> round TM to a multiple of 16.
    row_align = 16 if (compute_dtype.itemsize < 4
                       or jnp.dtype(out_dtype).itemsize < 4) else 8
    tm_auto, th_auto = _choose_tiles(
        M, C, H, budget=budget,
        x_bytes=x2.dtype.itemsize, out_bytes=jnp.dtype(out_dtype).itemsize,
        w_bytes=compute_dtype.itemsize, row_align=row_align,
        prefer_split_m=two_cores)
    tm = int(block_m) if block_m is not None else tm_auto
    th = int(block_h) if block_h is not None else th_auto
    assert tm == M or tm % 8 == 0, "block_m must be a multiple of 8 (or == B*T)"
    assert th == H or (H % th == 0 and th % 128 == 0), \
        "block_h must divide H and be a multiple of 128 (or equal H)"

    n_m = pl.cdiv(M, tm)
    n_h = pl.cdiv(H, th)

    sb = _single_buffer_kwargs()  # {} when pipeline_mode is unsupported

    # Advisory cost estimate for XLA's scheduler.
    flops = 4 * M * C * H  # two (M,C,H)-shaped matmuls
    bytes_accessed = int(x2.size * x2.dtype.itemsize
                         + (w1c.size + w2c.size) * compute_dtype.itemsize
                         + (H + C) * 4
                         + M * C * jnp.dtype(out_dtype).itemsize)
    cost = pl.CostEstimate(flops=flops, transcendentals=M * H,
                           bytes_accessed=bytes_accessed)

    if n_h == 1:
        # Resident-weight fast path: weights/biases DMA'd once, single-buffered.
        grid = (n_m,)
        in_specs = [
            pl.BlockSpec((tm, C), lambda i: (i, 0)),          # x tile
            pl.BlockSpec((C, H), lambda i: (0, 0), **sb),     # W1 (invariant)
            pl.BlockSpec((1, H), lambda i: (0, 0), **sb),     # b1 (invariant)
            pl.BlockSpec((H, C), lambda i: (0, 0), **sb),     # W2 (invariant)
            pl.BlockSpec((1, C), lambda i: (0, 0), **sb),     # b2 (invariant)
        ]
        out_specs = pl.BlockSpec((tm, C), lambda i: (i, 0))
        scratch = []
        dim_sem = ("parallel",)
        kernel = _make_fused_kernel(approx_gelu)
    else:
        # Hidden-dim reduction path: H innermost, f32 accumulator in VMEM.
        grid = (n_m, n_h)
        in_specs = [
            pl.BlockSpec((tm, C), lambda i, k: (i, 0)),       # x tile
            pl.BlockSpec((C, th), lambda i, k: (0, k)),       # W1 slice
            pl.BlockSpec((1, th), lambda i, k: (0, k)),       # b1 slice
            pl.BlockSpec((th, C), lambda i, k: (k, 0)),       # W2 slice
            pl.BlockSpec((1, C), lambda i, k: (0, 0), **sb),  # b2 (invariant)
        ]
        out_specs = pl.BlockSpec((tm, C), lambda i, k: (i, 0))
        scratch = [pltpu.VMEM((tm, C), jnp.float32)]
        dim_sem = ("parallel", "arbitrary")
        kernel = _make_reduce_kernel(approx_gelu)

    out = pl.pallas_call(
        kernel,
        out_shape=jax.ShapeDtypeStruct((M, C), out_dtype),
        grid_spec=pltpu.PrefetchScalarGridSpec(
            num_scalar_prefetch=0,
            grid=grid,
            in_specs=in_specs,
            out_specs=out_specs,
            scratch_shapes=scratch,
        ),
        compiler_params=pltpu.CompilerParams(
            dimension_semantics=dim_sem,
            vmem_limit_bytes=vmem_limit,
        ),
        cost_estimate=cost,
    )(x2, w1c, b1_2d, w2c, b2_2d)

    return out.reshape(B, T, C)


# --------------------------------------------------------------------------
# Self-test
# --------------------------------------------------------------------------
def _ref_mlp(x, w1, b1, w2, b2):
    """Pure-JAX reference (exact erf GELU == PyTorch nn.GELU())."""
    B, T, C = x.shape
    h = x.reshape(B * T, C) @ w1 + b1
    h = 0.5 * h * (1.0 + jax.lax.erf(h * _INV_SQRT2))
    return (h @ w2 + b2).reshape(B, T, C)


def _init_params(key, c, h):
    k1, kb1, k2, kb2 = jax.random.split(key, 4)
    bound1 = 1.0 / jnp.sqrt(jnp.float32(c))
    bound2 = 1.0 / jnp.sqrt(jnp.float32(h))
    w1 = jax.random.uniform(k1, (c, h), jnp.float32, -bound1, bound1)
    b1 = jax.random.uniform(kb1, (h,), jnp.float32, -bound1, bound1)
    w2 = jax.random.uniform(k2, (h, c), jnp.float32, -bound2, bound2)
    b2 = jax.random.uniform(kb2, (c,), jnp.float32, -bound2, bound2)
    return w1, b1, w2, b2


if __name__ == "__main__":
    # Config consistent with the module: n_embd=32, bias=True, dropout=0.0
    B, T, C = 2, 8, 32
    H = 4 * C

    key = jax.random.PRNGKey(0)
    kx, kp, kx2, kp2 = jax.random.split(key, 4)
    w1, b1, w2, b2 = _init_params(kp, C, H)
    x = jax.random.normal(kx, (B, T, C), jnp.float32)
    y_ref = _ref_mlp(x, w1, b1, w2, b2)

    # 1) Exact f32 MXU path, multi-M-tile grid on the resident-weight path.
    y_f32 = jax.block_until_ready(
        mlp_forward(x, w1, b1, w2, b2, block_m=8, compute_dtype=jnp.float32))
    assert y_f32.shape == (B, T, C)
    assert jnp.allclose(y_f32, y_ref, atol=1e-5, rtol=1e-5)

    # 2) Default path: bf16 MXU inputs, f32 accumulation, auto tiles.
    y_bf16 = jax.block_until_ready(mlp_forward(x, w1, b1, w2, b2))
    assert y_bf16.shape == (B, T, C)
    assert jnp.allclose(y_bf16, y_ref, atol=5e-2, rtol=5e-2)

    # 3) tanh-approx GELU path (opt-in).
    y_tanh = jax.block_until_ready(
        mlp_forward(x, w1, b1, w2, b2, compute_dtype=jnp.float32,
                    approx_gelu=True))
    assert jnp.allclose(y_tanh, y_ref, atol=5e-2, rtol=5e-2)

    # 4) Hidden-dim reduction path (n_h > 1): slightly larger config so the
    #    hidden tile (128) is a proper multiple of 128 and divides H.
    C2, H2 = 128, 512
    w1b, b1b, w2b, b2b = _init_params(kp2, C2, H2)
    x2 = jax.random.normal(kx2, (B, T, C2), jnp.float32)
    y2_ref = _ref_mlp(x2, w1b, b1b, w2b, b2b)
    y2 = jax.block_until_ready(
        mlp_forward(x2, w1b, b1b, w2b, b2b, block_m=8, block_h=128,
                    compute_dtype=jnp.float32))
    assert y2.shape == (B, T, C2)
    assert jnp.allclose(y2, y2_ref, atol=1e-5, rtol=1e-5)

    print("KERNEL_OK")
</pallas_src>

<mosaic_0001>
module attributes {stable_mosaic.version = 11 : i64} {
  func.func @kernel(%arg0: i32, %arg1: memref<8x32xf32, #tpu.memory_space<vmem>>, %arg2: memref<32x128xf32, #tpu.memory_space<vmem>>, %arg3: memref<1x128xf32, #tpu.memory_space<vmem>>, %arg4: memref<128x32xf32, #tpu.memory_space<vmem>>, %arg5: memref<1x32xf32, #tpu.memory_space<vmem>>, %arg6: memref<8x32xf32, #tpu.memory_space<vmem>>) attributes {dimension_semantics = [#tpu.dimension_semantics<parallel>], iteration_bounds = array<i64: 2>, scalar_prefetch = 0 : i64, scratch_operands = 0 : i64, tpu.core_type = #tpu.core_type<tc>, window_params = [{transform_indices = @transform_0, window_bounds = array<i64: 8, 32>}, {pipeline_mode = #tpu.pipeline_mode<synchronous>, transform_indices = @transform_1, window_bounds = array<i64: 32, 128>}, {pipeline_mode = #tpu.pipeline_mode<synchronous>, transform_indices = @transform_2, window_bounds = array<i64: 1, 128>}, {pipeline_mode = #tpu.pipeline_mode<synchronous>, transform_indices = @transform_3, window_bounds = array<i64: 128, 32>}, {pipeline_mode = #tpu.pipeline_mode<synchronous>, transform_indices = @transform_4, window_bounds = array<i64: 1, 32>}, {transform_indices = @transform_5, window_bounds = array<i64: 8, 32>}]} {
    %c0 = arith.constant 0 : index
    %c0_0 = arith.constant 0 : index
    %0 = vector.load %arg1[%c0, %c0_0] : memref<8x32xf32, #tpu.memory_space<vmem>>, vector<8x32xf32>
    %c0_1 = arith.constant 0 : index
    %c0_2 = arith.constant 0 : index
    %1 = vector.load %arg2[%c0_1, %c0_2] : memref<32x128xf32, #tpu.memory_space<vmem>>, vector<32x128xf32>
    %cst = arith.constant dense<0.000000e+00> : vector<8x128xf32>
    %2 = tpu.matmul %0, %1, %cst {dimension_numbers = #tpu.dot_dimension_numbers<[1], [0], [0], [1], [0, 0, 1, 1], [], []>} : vector<8x32xf32>, vector<32x128xf32>, vector<8x128xf32> -> vector<8x128xf32>
    %c0_3 = arith.constant 0 : index
    %c0_4 = arith.constant 0 : index
    %3 = vector.load %arg3[%c0_3, %c0_4] : memref<1x128xf32, #tpu.memory_space<vmem>>, vector<1x128xf32>
    %4 = vector.broadcast %3 : vector<1x128xf32> to vector<8x128xf32>
    %5 = arith.addf %2, %4 : vector<8x128xf32>
    %cst_5 = arith.constant 5.000000e-01 : f32
    %6 = vector.broadcast %cst_5 : f32 to vector<8x128xf32>
    %7 = arith.mulf %6, %5 : vector<8x128xf32>
    %cst_6 = arith.constant 0.707106769 : f32
    %8 = vector.broadcast %cst_6 : f32 to vector<8x128xf32>
    %9 = arith.mulf %5, %8 : vector<8x128xf32>
    %10 = math.erf %9 : vector<8x128xf32>
    %cst_7 = arith.constant 1.000000e+00 : f32
    %11 = vector.broadcast %cst_7 : f32 to vector<8x128xf32>
    %12 = arith.addf %11, %10 : vector<8x128xf32>
    %13 = arith.mulf %7, %12 : vector<8x128xf32>
    %c0_8 = arith.constant 0 : index
    %c0_9 = arith.constant 0 : index
    %14 = vector.load %arg4[%c0_8, %c0_9] : memref<128x32xf32, #tpu.memory_space<vmem>>, vector<128x32xf32>
    %cst_10 = arith.constant dense<0.000000e+00> : vector<8x32xf32>
    %15 = tpu.matmul %13, %14, %cst_10 {dimension_numbers = #tpu.dot_dimension_numbers<[1], [0], [0], [1], [0, 0, 1, 1], [], []>} : vector<8x128xf32>, vector<128x32xf32>, vector<8x32xf32> -> vector<8x32xf32>
    %c0_11 = arith.constant 0 : index
    %c0_12 = arith.constant 0 : index
    %16 = vector.load %arg5[%c0_11, %c0_12] : memref<1x32xf32, #tpu.memory_space<vmem>>, vector<1x32xf32>
    %17 = vector.broadcast %16 : vector<1x32xf32> to vector<8x32xf32>
    %18 = arith.addf %15, %17 : vector<8x32xf32>
    %c0_13 = arith.constant 0 : index
    %c0_14 = arith.constant 0 : index
    %19 = vector.load %arg6[%c0_13, %c0_14] : memref<8x32xf32, #tpu.memory_space<vmem>>, vector<8x32xf32>
    tpu.vector_store %arg6[%c0_13, %c0_14], %18 {strides = array<i32>} : memref<8x32xf32, #tpu.memory_space<vmem>>, vector<8x32xf32>,
    return
  }
  func.func @transform_0(%arg0: i32) -> (i32, i32) {
    %c0_i32 = arith.constant 0 : i32
    %c0_i32_0 = arith.constant 0 : i32
    return %arg0, %c0_i32 : i32, i32
  }
  func.func @transform_1(%arg0: i32) -> (i32, i32) {
    %c0_i32 = arith.constant 0 : i32
    %c0_i32_0 = arith.constant 0 : i32
    %c0_i32_1 = arith.constant 0 : i32
    return %c0_i32, %c0_i32_0 : i32, i32
  }
  func.func @transform_2(%arg0: i32) -> (i32, i32) {
    %c0_i32 = arith.constant 0 : i32
    %c0_i32_0 = arith.constant 0 : i32
    %c0_i32_1 = arith.constant 0 : i32
    return %c0_i32, %c0_i32_0 : i32, i32
  }
  func.func @transform_3(%arg0: i32) -> (i32, i32) {
    %c0_i32 = arith.constant 0 : i32
    %c0_i32_0 = arith.constant 0 : i32
    %c0_i32_1 = arith.constant 0 : i32
    return %c0_i32, %c0_i32_0 : i32, i32
  }
  func.func @transform_4(%arg0: i32) -> (i32, i32) {
    %c0_i32 = arith.constant 0 : i32
    %c0_i32_0 = arith.constant 0 : i32
    %c0_i32_1 = arith.constant 0 : i32
    return %c0_i32, %c0_i32_0 : i32, i32
  }
  func.func @transform_5(%arg0: i32) -> (i32, i32) {
    %c0_i32 = arith.constant 0 : i32
    %c0_i32_0 = arith.constant 0 : i32
    return %arg0, %c0_i32 : i32, i32
  }
}

</mosaic_0001>

<llo_original>
// kernel: tpu_custom_call.1
$region0: #{tpu_custom_call.1}
  #allocation0 [shape = 'u32[]', space=smem, size = 0x4, offset = 0x4, fixed_abs, tag = 'smem constant byte address 0x4 - core index']
  #allocation1 [shape = 'u32[144,128]{1,0:T(1,128)}', space=vmem, size = 0x12000, scoped, tag = 'internal scratch']
  %s0 = inlined_call_operand.vmem [shape: f32[16,32], index: 0, kind: input, shape index: {}]
  %s1 = inlined_call_operand.vmem [shape: f32[32,128], index: 1, kind: input, shape index: {}]
  %s2 = inlined_call_operand.vmem [shape: f32[1,128], index: 2, kind: input, shape index: {}]
  %s3 = inlined_call_operand.vmem [shape: f32[128,32], index: 3, kind: input, shape index: {}]
  %s4 = inlined_call_operand.vmem [shape: f32[1,32], index: 4, kind: input, shape index: {}]
  %s5 = inlined_call_operand.hbm [shape: f32[16,32], index: 5, kind: output, shape index: {}]
  %s6 = sld [smem:[#allocation0]]
  $region53: #{tpu_custom_call.1} parent=0
    _
  %s8 = ssub.s32 1, %s6
  %s9 = scalar_select 0, %s8, %s6
  $region1: #{tpu_custom_call.1} parent=0
    #allocation2 [shape = 'u8[8192]{0}', space=vmem, size = 0x2000, scoped, tag = 'output window, operand 0']
    #allocation3 [shape = 's32[2]{0}', space=sflag, size = 0x8, scoped, tag = 'scoped memory for tpu_custom_call.1']
    %10 = vsyncpa [#allocation3], 0
    %s11 = scalar_lea.sflag [#allocation3], 1
    %12 = vsyncpa %s11, 0
    loop: start=0, step=1, limit=4
    $region2: #{tpu_custom_call.1} parent=1 // loop_pre_header
      _
    $region3: #{tpu_custom_call.1} parent=1 // loop_header
      %s14 = sphi 0, %s18
      %p15 = scmp.ge.s32.totalorder %s14, 4
      %s24 = sphi 0, %s26
      %s27 = sphi 0, %s24
      %s28 = sphi 0, %s27
      %s44 = sphi 0, %s28
      %s48 = sphi 0, %s48
      %s50 = sphi 0, %s48
      %s51 = sphi 0, %s50
      %s65 = sphi 0, %s51
      %s69 = sphi 0, %s69
      %s71 = sphi 0, %s69
      %s72 = sphi 0, %s71
      %s86 = sphi 0, %s72
      %s90 = sphi 0, %s90
      %s92 = sphi 0, %s90
      %s93 = sphi 0, %s92
      %s107 = sphi 0, %s93
      %s111 = sphi 0, %s111
      %s113 = sphi 0, %s111
      %s114 = sphi 0, %s113
      %s128 = sphi 0, %s114
      %s134 = sphi 0, %s136
      %s137 = sphi 0, %s134
      %s138 = sphi 0, %s137
      %s154 = sphi 0, %s138
    $region4: #{tpu_custom_call.1} parent=1 // loop_header_branch
      %17 = sbr.rel (%p15) target = $region8
    $region5: #{tpu_custom_call.1} parent=1 // loop_body
      %s19 = ssub.s32 %s14, 1
      %s20 = ssub.s32 %s14, 2
      %s21 = sadd.s32 %s14, 1
      %s22 = ssub.s32 %s14, %s21
      %p23 = scmp.eq.s32.totalorder %s22, 0
      %s25 = sadd.s32 %s24, 1
      %s26 = scalar_select %p23, %s24, %s25
      %p29 = pneg %p23
      %p30 = scmp.eq.s32.totalorder %s14, 1
      %p31 = por %p29, %p30
      %p32 = scmp.ne.s32.totalorder %s24, %s27
      %p33 = scmp.eq.s32.totalorder %s14, 0
      %p34 = por %p32, %p33
      %p35 = scmp.ne.s32.totalorder %s24, %s27
      %p36 = scmp.eq.s32.totalorder %s19, 1
      %p37 = por %p35, %p36
      %p38 = scmp.ne.s32.totalorder %s27, %s28
      %p39 = scmp.eq.s32.totalorder %s19, 0
      %p40 = por %p38, %p39
      %p41 = scmp.ne.s32.totalorder %s27, %s28
      %p42 = scmp.eq.s32.totalorder %s20, 1
      %p43 = por %p41, %p42
      %p45 = scmp.ne.s32.totalorder %s28, %s44
      %p46 = scmp.eq.s32.totalorder %s20, 0
      %p47 = por %p45, %p46
      %s49 = sadd.s32 %s48, 1
      %p52 = scmp.eq.s32.totalorder %s14, 1
      %p53 = scmp.ne.s32.totalorder %s48, %s50
      %p54 = scmp.eq.s32.totalorder %s14, 0
      %p55 = por %p53, %p54
      %p56 = scmp.ne.s32.totalorder %s48, %s50
      %p57 = scmp.eq.s32.totalorder %s19, 1
      %p58 = por %p56, %p57
      %p59 = scmp.ne.s32.totalorder %s50, %s51
      %p60 = scmp.eq.s32.totalorder %s19, 0
      %p61 = por %p59, %p60
      %p62 = scmp.ne.s32.totalorder %s50, %s51
      %p63 = scmp.eq.s32.totalorder %s20, 1
      %p64 = por %p62, %p63
      %p66 = scmp.ne.s32.totalorder %s51, %s65
      %p67 = scmp.eq.s32.totalorder %s20, 0
      %p68 = por %p66, %p67
      %s70 = sadd.s32 %s69, 1
      %p73 = scmp.eq.s32.totalorder %s14, 1
      %p74 = scmp.ne.s32.totalorder %s69, %s71
      %p75 = scmp.eq.s32.totalorder %s14, 0
      %p76 = por %p74, %p75
      %p77 = scmp.ne.s32.totalorder %s69, %s71
      %p78 = scmp.eq.s32.totalorder %s19, 1
      %p79 = por %p77, %p78
      %p80 = scmp.ne.s32.totalorder %s71, %s72
      %p81 = scmp.eq.s32.totalorder %s19, 0
      %p82 = por %p80, %p81
      %p83 = scmp.ne.s32.totalorder %s71, %s72
      %p84 = scmp.eq.s32.totalorder %s20, 1
      %p85 = por %p83, %p84
      %p87 = scmp.ne.s32.totalorder %s72, %s86
      %p88 = scmp.eq.s32.totalorder %s20, 0
      %p89 = por %p87, %p88
      %s91 = sadd.s32 %s90, 1
      %p94 = scmp.eq.s32.totalorder %s14, 1
      %p95 = scmp.ne.s32.totalorder %s90, %s92
      %p96 = scmp.eq.s32.totalorder %s14, 0
      %p97 = por %p95, %p96
      %p98 = scmp.ne.s32.totalorder %s90, %s92
      %p99 = scmp.eq.s32.totalorder %s19, 1
      %p100 = por %p98, %p99
      %p101 = scmp.ne.s32.totalorder %s92, %s93
      %p102 = scmp.eq.s32.totalorder %s19, 0
      %p103 = por %p101, %p102
      %p104 = scmp.ne.s32.totalorder %s92, %s93
      %p105 = scmp.eq.s32.totalorder %s20, 1
      %p106 = por %p104, %p105
      %p108 = scmp.ne.s32.totalorder %s93, %s107
      %p109 = scmp.eq.s32.totalorder %s20, 0
      %p110 = por %p108, %p109
      %s112 = sadd.s32 %s111, 1
      %p115 = scmp.eq.s32.totalorder %s14, 1
      %p116 = scmp.ne.s32.totalorder %s111, %s113
      %p117 = scmp.eq.s32.totalorder %s14, 0
      %p118 = por %p116, %p117
      %p119 = scmp.ne.s32.totalorder %s111, %s113
      %p120 = scmp.eq.s32.totalorder %s19, 1
      %p121 = por %p119, %p120
      %p122 = scmp.ne.s32.totalorder %s113, %s114
      %p123 = scmp.eq.s32.totalorder %s19, 0
      %p124 = por %p122, %p123
      %p125 = scmp.ne.s32.totalorder %s113, %s114
      %p126 = scmp.eq.s32.totalorder %s20, 1
      %p127 = por %p125, %p126
      %p129 = scmp.ne.s32.totalorder %s114, %s128
      %p130 = scmp.eq.s32.totalorder %s20, 0
      %p131 = por %p129, %p130
      %s132 = ssub.s32 %s14, %s21
      %p133 = scmp.eq.s32.totalorder %s132, 0
      %s135 = sadd.s32 %s134, 1
      %s136 = scalar_select %p133, %s134, %s135
      %p139 = pneg %p133
      %p140 = scmp.eq.s32.totalorder %s14, 1
      %p141 = por %p139, %p140
      %p142 = scmp.ne.s32.totalorder %s134, %s137
      %p143 = scmp.eq.s32.totalorder %s14, 0
      %p144 = por %p142, %p143
      %p145 = scmp.ne.s32.totalorder %s134, %s137
      %p146 = scmp.eq.s32.totalorder %s19, 1
      %p147 = por %p145, %p146
      %p148 = scmp.ne.s32.totalorder %s137, %s138
      %p149 = scmp.eq.s32.totalorder %s19, 0
      %p150 = por %p148, %p149
      %p151 = scmp.ne.s32.totalorder %s137, %s138
      %p152 = scmp.eq.s32.totalorder %s20, 1
      %p153 = por %p151, %p152
      %p155 = scmp.ne.s32.totalorder %s138, %s154
      %p156 = scmp.eq.s32.totalorder %s20, 0
      %p157 = por %p155, %p156
      %p158 = scmp.le.s32.totalorder 1, %s14
      %p159 = scmp.lt.s32.totalorder %s14, 3
      %p160 = pnand %p158, %p159
      %p161 = pneg %p160
      // Predicated region
      $region9: #{tpu_custom_call.1} parent=5 // pred_check
        _
      $region10: #{tpu_custom_call.1} parent=5 // pred_check_branch
        %163 = sbr.rel (%p160) target = $region12
      $region11: #{tpu_custom_call.1} parent=5 // pred_region
        %s164 = ssub.s32 %s14, 1
        // Predicated region
        $region13: #{tpu_custom_call.1} parent=11 // pred_check
          %p165 = pneg %p61
        $region14: #{tpu_custom_call.1} parent=11 // pred_check_branch
          %167 = sbr.rel (%p165) target = $region16
        $region15: #{tpu_custom_call.1} parent=11 // pred_region
          _
        $region16: #{tpu_custom_call.1} parent=11 // pred_fallthru
          _
        // Predicated region
        $region17: #{tpu_custom_call.1} parent=11 // pred_check
          %p168 = pneg %p82
        $region18: #{tpu_custom_call.1} parent=11 // pred_check_branch
          %170 = sbr.rel (%p168) target = $region20
        $region19: #{tpu_custom_call.1} parent=11 // pred_region
          _
        $region20: #{tpu_custom_call.1} parent=11 // pred_fallthru
          _
        // Predicated region
        $region21: #{tpu_custom_call.1} parent=11 // pred_check
          %p171 = pneg %p103
        $region22: #{tpu_custom_call.1} parent=11 // pred_check_branch
          %173 = sbr.rel (%p171) target = $region24
        $region23: #{tpu_custom_call.1} parent=11 // pred_region
          _
        $region24: #{tpu_custom_call.1} parent=11 // pred_fallthru
          _
        // Predicated region
        $region25: #{tpu_custom_call.1} parent=11 // pred_check
          %p174 = pneg %p124
        $region26: #{tpu_custom_call.1} parent=11 // pred_check_branch
          %176 = sbr.rel (%p174) target = $region28
        $region27: #{tpu_custom_call.1} parent=11 // pred_region
          _
        $region28: #{tpu_custom_call.1} parent=11 // pred_fallthru
          _
      $region12: #{tpu_custom_call.1} parent=5 // pred_fallthru
        _
      %p177 = scmp.lt.s32.totalorder %s14, 2
      // Predicated region
      $region29: #{tpu_custom_call.1} parent=5 // pred_check
        %p178 = pneg %p177
      $region30: #{tpu_custom_call.1} parent=5 // pred_check_branch
        %180 = sbr.rel (%p178) target = $region32
      $region31: #{tpu_custom_call.1} parent=5 // pred_region
        // Predicated region
        $region33: #{tpu_custom_call.1} parent=31 // pred_check
          %p181 = pneg %p34
        $region34: #{tpu_custom_call.1} parent=31 // pred_check_branch
          %183 = sbr.rel (%p181) target = $region36
        $region35: #{tpu_custom_call.1} parent=31 // pred_region
          %p184 = scmp.lt.s32.totalorder %s14, 1
          %s185 = scalar_select %p184, %s14, 1
          %s186 = smul.addr %s185, 8
          %s187 = scalar_lea.vmem %s0, %s186
        $region36: #{tpu_custom_call.1} parent=31 // pred_fallthru
          _
      $region32: #{tpu_custom_call.1} parent=5 // pred_fallthru
        _
      %p188 = scmp.le.s32.totalorder 1, %s14
      %p189 = scmp.lt.s32.totalorder %s14, 3
      %p190 = pnand %p188, %p189
      %p191 = pneg %p190
      // Predicated region
      $region37: #{tpu_custom_call.1} parent=5 // pred_check
        _
      $region38: #{tpu_custom_call.1} parent=5 // pred_check_branch
        %193 = sbr.rel (%p190) target = $region40
      $region39: #{tpu_custom_call.1} parent=5 // pred_region
        %s194 = ssub.s32 %s14, 1
        %p195 = scmp.lt.s32.totalorder %s19, 1
        %s196 = scalar_select %p195, %s19, 1
        %s197 = smul.addr %s196, 8
        %s198 = scalar_lea.vmem %s0, %s197
        %p199 = pneg %p40
        %p200 = pneg %p37
        %p201 = pneg %p61
        %p202 = pneg %p58
        %p203 = pneg %p82
        %p204 = pneg %p79
        %p205 = pneg %p103
        %p206 = pneg %p100
        %p207 = pneg %p124
        %p208 = pneg %p121
        %p209 = pneg %p150
        %p210 = pneg %p147
        %s211 = sand.u32 %s137, 1
        %s212 = scalar_lea.sflag [#allocation3], %s211
        %s213 = sand.u32 %s137, 1
        %s214 = smul.addr %s213, 8
        %s215 = scalar_lea.vmem [#allocation2], %s214
        %p216 = scmp.lt.s32.totalorder %s19, 1
        %s217 = scalar_select %p216, %s19, 1
        %s218 = smul.addr %s217, 8
        %s219 = scalar_lea.vmem %s0, %s218
        %v220 = vld [vmem:[%s219] sm:$0xff]
        %v221 = vld [vmem:[%s1] sm:$0xff]
        %v222 = vld [vmem:[%s1 + $0x8] sm:$0xff]
        %v223 = vld [vmem:[%s1 + $0x10] sm:$0xff]
        %v224 = vld [vmem:[%s1 + $0x18] sm:$0xff]
        %v225 = vld [vmem:[%s2] sm:$0x1]
        %v227 = vlaneseq
        %v228 = vshrl.u32 %v227, 7
        %v229 = vsub.s32 0, %v228
        %v230 = vrot.slane %v225, %v229
        %vm232 = vcmask 261120
        %v234 = vsel %vm232, %v220, 0
        %236 = vmatprep.subr.mxu0 0.0
        %237 = vmatpush1.msra.mxu0 %v221
        %238 = vmatprep.subr.mxu0 0.0
        %239 = vmatpush1.msra.mxu0 %v222
        %240 = vmatprep.subr.mxu0 0.0
        %241 = vmatpush1.msra.mxu0 %v223
        %242 = vmatprep.subr.mxu0 0.0
        %243 = vmatpush1.msra.mxu0 %v224
        %244 = vmatprep.subr.mxu0 0.0
        %245 = vmatpush1.msra.mxu0 0.0
        %246 = vmatprep.subr.mxu0 0.0
        %247 = vmatpush1.msra.mxu0 0.0
        %248 = vmatprep.subr.mxu0 0.0
        %249 = vmatpush1.msra.mxu0 0.0
        %250 = vmatprep.subr.mxu0 0.0
        %251 = vmatpush1.msra.mxu0 0.0
        %252 = vmatprep.subr.mxu0 0.0
        %253 = vmatpush1.msra.mxu0 0.0
        %254 = vmatprep.subr.mxu0 0.0
        %255 = vmatpush1.msra.mxu0 0.0
        %256 = vmatprep.subr.mxu0 0.0
        %257 = vmatpush1.msra.mxu0 0.0
        %258 = vmatprep.subr.mxu0 0.0
        %259 = vmatpush1.msra.mxu0 0.0
        %260 = vmatprep.subr.mxu0 0.0
        %261 = vmatpush1.msra.mxu0 0.0
        %262 = vmatprep.subr.mxu0 0.0
        %263 = vmatpush1.msra.mxu0 0.0
        %264 = vmatprep.subr.mxu0 0.0
        %265 = vmatpush1.msra.mxu0 0.0
        %266 = vmatprep.subr.mxu0 0.0
        %267 = vmatpush1.msra.mxu0 0.0
        %268 = vmatprep.subr.mxu0 0.0
        %269 = vmatpush1.msra.mxu0 0.0
        %270 = vmatprep.subr.mxu0 0.0
        %271 = vmatpush1.msra.mxu0 0.0
        %272 = vmatprep.subr.mxu0 0.0
        %273 = vmatpush1.msra.mxu0 0.0
        %274 = vmatprep.subr.mxu0 0.0
        %275 = vmatpush1.msra.mxu0 0.0
        %276 = vmatprep.subr.mxu0 0.0
        %277 = vmatpush1.msra.mxu0 0.0
        %278 = vmatprep.subr.mxu0 0.0
        %279 = vmatpush1.msra.mxu0 0.0
        %280 = vmatprep.subr.mxu0 0.0
        %281 = vmatpush1.msra.mxu0 0.0
        %282 = vmatprep.subr.mxu0 0.0
        %283 = vmatpush1.msra.mxu0 0.0
        %284 = vmatprep.subr.mxu0 0.0
        %285 = vmatpush1.msra.mxu0 0.0
        %286 = vmatprep.subr.mxu0 0.0
        %287 = vmatpush1.msra.mxu0 0.0
        %288 = vmatprep.subr.mxu0 0.0
        %289 = vmatpush1.msra.mxu0 0.0
        %290 = vmatprep.subr.mxu0 0.0
        %291 = vmatpush1.msra.mxu0 0.0
        %292 = vmatprep.subr.mxu0 0.0
        %293 = vmatpush1.msra.mxu0 0.0
        %294 = vmatprep.subr.mxu0 0.0
        %295 = vmatpush1.msra.mxu0 0.0
        %296 = vmatprep.subr.mxu0 0.0
        %297 = vmatpush1.msra.mxu0 0.0
        %298 = vmatprep.subr.mxu0 0.0
        %299 = vmatpush1.msra.mxu0 0.0
        %300 = vmatprep.mubr.f32.mxu0 0.0
        %301 = vmatmul.mubr.f32.gmra.mrb[0].mxu0 %v234
        %v302 = vpop.f32.mrb[0].mxu0
        %v303 = vadd.f32 %v230, %v302
        %v304 = vpop.f32.mrb[0].mxu0
        %305 = vdwg.mxu0
        %v306 = vmul.f32 %v303, 0.5
        %v307 = vmul.f32 %v303, 0.70710677
        %v308 = verf.f32.pop %v307
        %v309 = vadd.f32 %v308, 1.0
        %v310 = vmul.f32 %v306, %v309
        %v311 = vld [vmem:[%s3] sm:$0xff]
        %v312 = vld [vmem:[%s3 + $0x8] sm:$0xff]
        %v313 = vld [vmem:[%s3 + $0x10] sm:$0xff]
        %v314 = vld [vmem:[%s3 + $0x18] sm:$0xff]
        %v315 = vld [vmem:[%s3 + $0x20] sm:$0xff]
        %v316 = vld [vmem:[%s3 + $0x28] sm:$0xff]
        %v317 = vld [vmem:[%s3 + $0x30] sm:$0xff]
        %v318 = vld [vmem:[%s3 + $0x38] sm:$0xff]
        %v319 = vld [vmem:[%s3 + $0x40] sm:$0xff]
        %v320 = vld [vmem:[%s3 + $0x48] sm:$0xff]
        %v321 = vld [vmem:[%s3 + $0x50] sm:$0xff]
        %v322 = vld [vmem:[%s3 + $0x58] sm:$0xff]
        %v323 = vld [vmem:[%s3 + $0x60] sm:$0xff]
        %v324 = vld [vmem:[%s3 + $0x68] sm:$0xff]
        %v325 = vld [vmem:[%s3 + $0x70] sm:$0xff]
        %v326 = vld [vmem:[%s3 + $0x78] sm:$0xff]
        %v327 = vld [vmem:[%s4] sm:$0x1]
        %v329 = vlaneseq
        %v330 = vshrl.u32 %v329, 7
        %v331 = vsub.s32 0, %v330
        %v332 = vrot.slane %v327, %v331
        %334 = vmatprep.subr.mxu0 0.0
        %335 = vmatpush1.msra.mxu0 %v311
        %336 = vmatprep.subr.mxu0 0.0
        %337 = vmatpush1.msra.mxu0 %v312
        %338 = vmatprep.subr.mxu0 0.0
        %339 = vmatpush1.msra.mxu0 %v313
        %340 = vmatprep.subr.mxu0 0.0
        %341 = vmatpush1.msra.mxu0 %v314
        %342 = vmatprep.subr.mxu0 0.0
        %343 = vmatpush1.msra.mxu0 %v315
        %344 = vmatprep.subr.mxu0 0.0
        %345 = vmatpush1.msra.mxu0 %v316
        %346 = vmatprep.subr.mxu0 0.0
        %347 = vmatpush1.msra.mxu0 %v317
        %348 = vmatprep.subr.mxu0 0.0
        %349 = vmatpush1.msra.mxu0 %v318
        %350 = vmatprep.subr.mxu0 0.0
        %351 = vmatpush1.msra.mxu0 %v319
        %352 = vmatprep.subr.mxu0 0.0
        %353 = vmatpush1.msra.mxu0 %v320
        %354 = vmatprep.subr.mxu0 0.0
        %355 = vmatpush1.msra.mxu0 %v321
        %356 = vmatprep.subr.mxu0 0.0
        %357 = vmatpush1.msra.mxu0 %v322
        %358 = vmatprep.subr.mxu0 0.0
        %359 = vmatpush1.msra.mxu0 %v323
        %360 = vmatprep.subr.mxu0 0.0
        %361 = vmatpush1.msra.mxu0 %v324
        %362 = vmatprep.subr.mxu0 0.0
        %363 = vmatpush1.msra.mxu0 %v325
        %364 = vmatprep.subr.mxu0 0.0
        %365 = vmatpush1.msra.mxu0 %v326
        %366 = vmatprep.subr.mxu0 0.0
        %367 = vmatpush1.msra.mxu0 0.0
        %368 = vmatprep.subr.mxu0 0.0
        %369 = vmatpush1.msra.mxu0 0.0
        %370 = vmatprep.subr.mxu0 0.0
        %371 = vmatpush1.msra.mxu0 0.0
        %372 = vmatprep.subr.mxu0 0.0
        %373 = vmatpush1.msra.mxu0 0.0
        %374 = vmatprep.subr.mxu0 0.0
        %375 = vmatpush1.msra.mxu0 0.0
        %376 = vmatprep.subr.mxu0 0.0
        %377 = vmatpush1.msra.mxu0 0.0
        %378 = vmatprep.subr.mxu0 0.0
        %379 = vmatpush1.msra.mxu0 0.0
        %380 = vmatprep.subr.mxu0 0.0
        %381 = vmatpush1.msra.mxu0 0.0
        %382 = vmatprep.subr.mxu0 0.0
        %383 = vmatpush1.msra.mxu0 0.0
        %384 = vmatprep.subr.mxu0 0.0
        %385 = vmatpush1.msra.mxu0 0.0
        %386 = vmatprep.subr.mxu0 0.0
        %387 = vmatpush1.msra.mxu0 0.0
        %388 = vmatprep.subr.mxu0 0.0
        %389 = vmatpush1.msra.mxu0 0.0
        %390 = vmatprep.subr.mxu0 0.0
        %391 = vmatpush1.msra.mxu0 0.0
        %392 = vmatprep.subr.mxu0 0.0
        %393 = vmatpush1.msra.mxu0 0.0
        %394 = vmatprep.subr.mxu0 0.0
        %395 = vmatpush1.msra.mxu0 0.0
        %396 = vmatprep.subr.mxu0 0.0
        %397 = vmatpush1.msra.mxu0 0.0
        %398 = vmatprep.mubr.f32.mxu0 0.0
        %399 = vmatmul.mubr.f32.gmra.mrb[0].mxu0 %v310
        %v400 = vpop.f32.mrb[0].mxu0
        %v401 = vadd.f32 %v332, %v400
        %v402 = vpop.f32.mrb[0].mxu0
        %403 = vdwg.mxu0
        %404 = vst.msk [vmem:[%s215] sm:$0xff] %vm232, %v401
        %s405 = sand.u32 %s137, 1
        %s406 = scalar_lea.sflag [#allocation3], %s405
        %s407 = sand.u32 %s137, 1
        %s408 = smul.addr %s407, 8
        %s409 = scalar_lea.vmem [#allocation2], %s408
        // Predicated region
        $region41: #{tpu_custom_call.1} parent=39 // pred_check
          %p410 = pneg %p147
        $region42: #{tpu_custom_call.1} parent=39 // pred_check_branch
          %412 = sbr.rel (%p410) target = $region44
        $region43: #{tpu_custom_call.1} parent=39 // pred_region
          %s414 = ssub.s32 128, 128
          %415 = vsyncadd %s406, %s414
          %s416 = smul.addr %s19, 128
          %s417 = scalar_lea.hbm %s5, %s416
          %s419 = sshll.u32 %s409, 4
          %s420 = int_to_ptr.vmem [resolvable:$true] %s419
          %422 = dma.vmem_to_hbm [thread:$0]  %s420, 128, %s417, %s406
        $region44: #{tpu_custom_call.1} parent=39 // pred_fallthru
          _
      $region40: #{tpu_custom_call.1} parent=5 // pred_fallthru
        _
      %p423 = scmp.le.s32.totalorder 2, %s14
      // Predicated region
      $region45: #{tpu_custom_call.1} parent=5 // pred_check
        %p424 = pneg %p423
      $region46: #{tpu_custom_call.1} parent=5 // pred_check_branch
        %426 = sbr.rel (%p424) target = $region48
      $region47: #{tpu_custom_call.1} parent=5 // pred_region
        %s427 = ssub.s32 %s14, 2
        // Predicated region
        $region49: #{tpu_custom_call.1} parent=47 // pred_check
          %p428 = pneg %p153
        $region50: #{tpu_custom_call.1} parent=47 // pred_check_branch
          %430 = sbr.rel (%p428) target = $region52
        $region51: #{tpu_custom_call.1} parent=47 // pred_region
          %s431 = sand.u32 %s138, 1
          %s432 = scalar_lea.sflag [#allocation3], %s431
          %s433 = sand.u32 %s138, 1
          %s434 = smul.addr %s433, 8
          %s435 = scalar_lea.vmem [#allocation2], %s434
          %436 = dma.done %s432, 128
        $region52: #{tpu_custom_call.1} parent=47 // pred_fallthru
          _
      $region48: #{tpu_custom_call.1} parent=5 // pred_fallthru
        _
    $region6: #{tpu_custom_call.1} parent=1 // loop_footer
      %s18 = sadd.s32 1, %s14
    $region7: #{tpu_custom_call.1} parent=1 // loop_footer_branch
      %13 = sbr.rel target = $region3
    $region8: #{tpu_custom_call.1} parent=1 // loop_exit
      _
    %437 = vsyncpa [#allocation3], 1
    %s438 = scalar_lea.sflag [#allocation3], 1
    %439 = vsyncpa %s438, 1

</llo_original>
